<compile_context>
chip_gen: v7x
topology: tpu7x:2x2x1
jax: 0.10.0
libtpu: 0.0.40
codegen_flags: <defaults>
</compile_context>

<pallas_src>
import functools

import numpy as np
import jax
import jax.numpy as jnp
from jax import lax
from jax.experimental import pallas as pl
from jax.experimental.pallas import tpu as pltpu

_LANE = 128
_SUBLANE = 8


def _round_up(x, m):
    return ((x + m - 1) // m) * m


@functools.lru_cache(maxsize=1)
def _vmem_budget_and_limit():
    """(working budget, vmem_limit cap) derived from the chip's VMEM size."""
    cap = 128 * 1024 * 1024  # v5e / v6e default
    try:
        info = pltpu.get_tpu_info()
        cap = int(getattr(info, "vmem_capacity_bytes", cap))
    except Exception:
        pass
    # 128 MiB chips (v5e/v6e): budget ~80 MiB, limit ~96 MiB.
    #  64 MiB chips (v7x):     budget ~32 MiB, limit ~48 MiB.
    budget = max(16 * 1024 * 1024, (3 * cap) // 4 - 16 * 1024 * 1024)
    limit = max(32 * 1024 * 1024, (3 * cap) // 4)
    return budget, limit


def _choose_padded_targets(num_targets):
    """Lane-pad the target dim only when the relative padding cost is small.

    For tiny T (e.g. 8) padding to 128 inflates output HBM writeback 16x on a
    memory-bound kernel, which costs far more than the masked vst it avoids.
    """
    if num_targets % _LANE == 0 or num_targets < 64:
        return num_targets
    return _round_up(num_targets, _LANE)


# ---------------------------------------------------------------------------
# Dense row-tiled linear:  y = x @ W + b
# ---------------------------------------------------------------------------

def _dense_kernel(x_ref, w_ref, b_ref, o_ref, *, compute_dtype):
    # In-kernel cast (VPU work hidden under the tile DMAs) instead of a
    # wrapper-side HBM read+write pass.
    x = x_ref[...].astype(compute_dtype)
    acc = jnp.dot(x, w_ref[...], preferred_element_type=jnp.float32)
    o_ref[...] = (acc + b_ref[...]).astype(o_ref.dtype)


def _dense_kernel_ksplit(x_ref, w_ref, b_ref, o_ref, acc_ref, *, compute_dtype):
    kk = pl.program_id(1)

    @pl.when(kk == 0)
    def _():
        acc_ref[...] = jnp.zeros_like(acc_ref)

    x = x_ref[...].astype(compute_dtype)
    acc_ref[...] += jnp.dot(x, w_ref[...], preferred_element_type=jnp.float32)

    @pl.when(kk == pl.num_programs(1) - 1)
    def _():
        o_ref[...] = (acc_ref[...] + b_ref[...]).astype(o_ref.dtype)


def pallas_linear(x, w_p, b_p, *, tm=512, compute_dtype=jnp.float32,
                  out_dtype=None):
    """y = x @ w_p + b_p.  w_p: (K, Tp) pre-cast/pre-padded, b_p: (1, Tp) f32.

    Returns (M, Tp).  The ragged last row tile relies on Pallas masking OOB
    output rows (rows are independent).
    """
    M, K = x.shape
    Kw, Tp = w_p.shape
    assert Kw == K
    if out_dtype is None:
        out_dtype = x.dtype
    if M == 0:
        return jnp.zeros((0, Tp), out_dtype)

    budget, limit_cap = _vmem_budget_and_limit()
    x_item = jnp.dtype(x.dtype).itemsize
    w_item = jnp.dtype(w_p.dtype).itemsize
    o_item = jnp.dtype(out_dtype).itemsize
    c_item = jnp.dtype(compute_dtype).itemsize

    tm_eff = min(_round_up(int(tm), _SUBLANE), _round_up(M, _SUBLANE))

    # Pallas double-buffers every BlockSpec input, even with a constant
    # index_map, so the resident weight is counted twice here.
    # TODO(synk): mark weight/bias BlockSpecs pipeline_mode=pl.Buffered(1)
    # (single-buffered, never re-DMAed) once validated on the target jax
    # version; that halves the weight VMEM reservation on 64 MiB chips.
    def need_resident(t):
        return (2 * t * K * x_item            # x row tiles (double-buffered)
                + 2 * K * Tp * w_item         # resident weights
                + 2 * t * Tp * o_item         # output tiles
                + 2 * Tp * 4                  # bias
                + t * K * c_item + t * Tp * 4)  # in-kernel cast / acc temps

    # Switch to a K-reduction grid axis only when the resident weight slab is
    # what blows the budget and K is 128-aligned (a ragged K block would feed
    # garbage into the reduction, unlike ragged independent rows).
    use_ksplit = (2 * K * Tp * w_item > budget // 2) and (K % _LANE == 0)

    if not use_ksplit:
        while tm_eff > _SUBLANE and need_resident(tm_eff) > budget:
            tm_eff = max(_SUBLANE, _round_up(tm_eff // 2, _SUBLANE))
        need = need_resident(tm_eff)
        grid = (pl.cdiv(M, tm_eff),)
        kernel = functools.partial(_dense_kernel, compute_dtype=compute_dtype)
        in_specs = [pl.BlockSpec((tm_eff, K), lambda i: (i, 0)),
                    pl.BlockSpec((K, Tp), lambda i: (0, 0)),
                    pl.BlockSpec((1, Tp), lambda i: (0, 0))]
        out_specs = pl.BlockSpec((tm_eff, Tp), lambda i: (i, 0))
        scratch = []
        dims = ("parallel",)
    else:
        tk = next(c for c in (1024, 512, 256, 128) if K % c == 0)

        def need_ksplit(t):
            return (2 * t * tk * x_item + 2 * tk * Tp * w_item
                    + 2 * t * Tp * o_item + 2 * Tp * 4
                    + t * Tp * 4              # f32 accumulator scratch
                    + t * tk * c_item)

        while tm_eff > _SUBLANE and need_ksplit(tm_eff) > budget:
            tm_eff = max(_SUBLANE, _round_up(tm_eff // 2, _SUBLANE))
        need = need_ksplit(tm_eff)
        grid = (pl.cdiv(M, tm_eff), K // tk)
        kernel = functools.partial(_dense_kernel_ksplit,
                                   compute_dtype=compute_dtype)
        in_specs = [pl.BlockSpec((tm_eff, tk), lambda i, kk: (i, kk)),
                    pl.BlockSpec((tk, Tp), lambda i, kk: (kk, 0)),
                    pl.BlockSpec((1, Tp), lambda i, kk: (0, 0))]
        out_specs = pl.BlockSpec((tm_eff, Tp), lambda i, kk: (i, 0))
        scratch = [pltpu.VMEM((tm_eff, Tp), jnp.float32)]
        dims = ("parallel", "arbitrary")

    vmem_limit = int(min(limit_cap, max(2 * need, 32 * 1024 * 1024)))
    cost = pl.CostEstimate(
        flops=2 * M * K * Tp, transcendentals=0,
        bytes_accessed=(M * K * x_item + K * Tp * w_item + Tp * 4
                        + M * Tp * o_item))

    return pl.pallas_call(
        kernel,
        out_shape=jax.ShapeDtypeStruct((M, Tp), out_dtype),
        grid_spec=pltpu.PrefetchScalarGridSpec(
            num_scalar_prefetch=0, grid=grid,
            in_specs=in_specs, out_specs=out_specs,
            scratch_shapes=scratch),
        compiler_params=pltpu.CompilerParams(
            dimension_semantics=dims, vmem_limit_bytes=vmem_limit),
        cost_estimate=cost,
    )(x, w_p, b_p)


# ---------------------------------------------------------------------------
# Link-prediction readout with fused row gather:
#   y = X[src] @ W_src + X[tgt] @ W_tgt + b
# ---------------------------------------------------------------------------

def _lp_gather_kernel(src_ref, tgt_ref, x_hbm, ws_ref, wt_ref, b_ref, o_ref,
                      xs_buf, xt_buf, sem, *, tm, compute_dtype):
    base = pl.program_id(0) * tm

    def issue(r, carry):
        s = src_ref[base + r]
        t = tgt_ref[base + r]
        pltpu.make_async_copy(x_hbm.at[pl.ds(s, 1), :],
                              xs_buf.at[pl.ds(r, 1), :], sem.at[0]).start()
        pltpu.make_async_copy(x_hbm.at[pl.ds(t, 1), :],
                              xt_buf.at[pl.ds(r, 1), :], sem.at[1]).start()
        return carry

    lax.fori_loop(0, tm, issue, 0)

    def drain(r, carry):
        # A wait only needs the transfer size (one row); all row copies on a
        # given semaphore are the same size, so tm waits drain tm starts.
        pltpu.make_async_copy(x_hbm.at[pl.ds(0, 1), :],
                              xs_buf.at[pl.ds(0, 1), :], sem.at[0]).wait()
        pltpu.make_async_copy(x_hbm.at[pl.ds(0, 1), :],
                              xt_buf.at[pl.ds(0, 1), :], sem.at[1]).wait()
        return carry

    lax.fori_loop(0, tm, drain, 0)

    acc = jnp.dot(xs_buf[...].astype(compute_dtype), ws_ref[...],
                  preferred_element_type=jnp.float32)
    acc = acc + jnp.dot(xt_buf[...].astype(compute_dtype), wt_ref[...],
                        preferred_element_type=jnp.float32)
    o_ref[...] = (acc + b_ref[...]).astype(o_ref.dtype)


def pallas_linear_link_pred(X, src_ids, tgt_ids, w_src_p, w_tgt_p, b_p, *,
                            tm=256, compute_dtype=jnp.float32, out_dtype=None):
    """Fused link-pred readout: the (E, F) gathers / (E, 2F) concat are never
    materialized in HBM; rows are DMA-gathered per tile inside the kernel."""
    N, F = X.shape
    Fw, Tp = w_src_p.shape
    assert Fw == F and w_tgt_p.shape == (F, Tp)
    E = int(src_ids.shape[0])
    if out_dtype is None:
        out_dtype = X.dtype
    if E == 0:
        return jnp.zeros((0, Tp), out_dtype)

    budget, limit_cap = _vmem_budget_and_limit()
    x_item = jnp.dtype(X.dtype).itemsize
    w_item = jnp.dtype(w_src_p.dtype).itemsize
    o_item = jnp.dtype(out_dtype).itemsize
    c_item = jnp.dtype(compute_dtype).itemsize

    tm_eff = min(_round_up(int(tm), _SUBLANE), _round_up(E, _SUBLANE))

    def need(t):
        return (2 * t * F * x_item            # src/tgt gather scratch
                + 2 * 2 * F * Tp * w_item     # both weight halves
                + 2 * t * Tp * o_item         # output tiles
                + 2 * Tp * 4                  # bias
                + 2 * t * F * c_item + t * Tp * 4)

    while tm_eff > _SUBLANE and need(tm_eff) > budget:
        tm_eff = max(_SUBLANE, _round_up(tm_eff // 2, _SUBLANE))

    # Pad the edge count to a whole number of row tiles so the compiled kernel
    # is reused across snapshots in the same (tm, grid) bucket and every block
    # is full.  Padded rows gather node 0 and are sliced away below.
    E_pad = _round_up(E, tm_eff)
    src_p = jnp.zeros((E_pad,), jnp.int32).at[:E].set(
        jnp.asarray(src_ids, dtype=jnp.int32))
    tgt_p = jnp.zeros((E_pad,), jnp.int32).at[:E].set(
        jnp.asarray(tgt_ids, dtype=jnp.int32))

    vmem_limit = int(min(limit_cap, max(2 * need(tm_eff), 32 * 1024 * 1024)))
    cost = pl.CostEstimate(
        flops=2 * E_pad * (2 * F) * Tp, transcendentals=0,
        bytes_accessed=(E_pad * 2 * F * x_item + 2 * F * Tp * w_item + Tp * 4
                        + E_pad * Tp * o_item))

    kernel = functools.partial(_lp_gather_kernel, tm=tm_eff,
                               compute_dtype=compute_dtype)
    out = pl.pallas_call(
        kernel,
        out_shape=jax.ShapeDtypeStruct((E_pad, Tp), out_dtype),
        grid_spec=pltpu.PrefetchScalarGridSpec(
            num_scalar_prefetch=2,                      # src ids, tgt ids -> SMEM
            grid=(E_pad // tm_eff,),
            in_specs=[
                pl.BlockSpec(memory_space=pl.ANY),              # X stays in HBM
                pl.BlockSpec((F, Tp), lambda i, s, t: (0, 0)),  # W (source half)
                pl.BlockSpec((F, Tp), lambda i, s, t: (0, 0)),  # W (target half)
                pl.BlockSpec((1, Tp), lambda i, s, t: (0, 0)),  # bias
            ],
            out_specs=pl.BlockSpec((tm_eff, Tp), lambda i, s, t: (i, 0)),
            scratch_shapes=[
                pltpu.VMEM((tm_eff, F), X.dtype),       # gathered source rows
                pltpu.VMEM((tm_eff, F), X.dtype),       # gathered target rows
                pltpu.SemaphoreType.DMA((2,)),
            ]),
        compiler_params=pltpu.CompilerParams(
            dimension_semantics=("arbitrary",),
            vmem_limit_bytes=vmem_limit),
        cost_estimate=cost,
    )(src_p, tgt_p, X, w_src_p, w_tgt_p, b_p)
    # TODO(synk): double-buffer the row gather across grid steps
    # (scratch (2, tm, F) + per-slot sems) so gather latency hides under the
    # previous tile's matmul.
    return out[:E]


# ---------------------------------------------------------------------------
# Module
# ---------------------------------------------------------------------------

class LinearReadout:
    """JAX/Pallas port of the PyTorch LinearReadout module."""

    def __init__(self, num_features, num_targets, link_prediction=False,
                 key=None, compute_dtype=jnp.float32, out_dtype=None):
        self.num_features = int(num_features)
        self.num_targets = int(num_targets)
        self.link_prediction = bool(link_prediction)
        # compute_dtype=bf16 / out_dtype=bf16 are opt-in bandwidth savers on
        # v6e/v7x; they change numerics vs the torch f32 reference.
        self.compute_dtype = compute_dtype
        self.out_dtype = out_dtype

        in_features = num_features * 2 if link_prediction else num_features
        if key is None:
            key = jax.random.PRNGKey(0)
        kw, kb = jax.random.split(key)
        # torch.nn.Linear default init: U(-1/sqrt(fan_in), 1/sqrt(fan_in)).
        # Stored transposed (in, out) so the kernels compute x @ W directly.
        bound = 1.0 / np.sqrt(in_features)
        self.weight = jax.random.uniform(
            kw, (in_features, num_targets), jnp.float32, -bound, bound)
        self.bias = jax.random.uniform(
            kb, (num_targets,), jnp.float32, -bound, bound)

        # Kernel operands: padded / cast ONCE here, not per call.
        Tp = _choose_padded_targets(self.num_targets)
        self._Tp = Tp
        w_p = jnp.zeros((in_features, Tp), compute_dtype)
        w_p = w_p.at[:, :self.num_targets].set(self.weight.astype(compute_dtype))
        self._w_p = w_p
        self._b_p = jnp.zeros((1, Tp), jnp.float32).at[:, :self.num_targets].set(
            self.bias.astype(jnp.float32))
        if link_prediction:
            self._w_src_p = self._w_p[:self.num_features]
            self._w_tgt_p = self._w_p[self.num_features:]

    def _trim(self, y):
        return y if self._Tp == self.num_targets else y[:, :self.num_targets]

    def __call__(self, X, snapshot):
        if "link_pred_ids" in snapshot:
            source, target = snapshot["link_pred_ids"]
            y = pallas_linear_link_pred(
                X, source, target, self._w_src_p, self._w_tgt_p, self._b_p,
                compute_dtype=self.compute_dtype, out_dtype=self.out_dtype)
            return self._trim(y)

        if "node_mask" in snapshot and snapshot["node_mask"] is not None:
            # Fixed-shape kernel over ALL node rows (Mosaic compile cache hits
            # across snapshots regardless of mask popcount), then a tiny row
            # select.  A boolean mask implies a data-dependent output shape,
            # so it is resolved host-side, matching PyTorch's x[mask].
            mask = np.asarray(snapshot["node_mask"])
            y_all = pallas_linear(X, self._w_p, self._b_p,
                                  compute_dtype=self.compute_dtype,
                                  out_dtype=self.out_dtype)
            rows = np.nonzero(mask)[0] if mask.dtype == np.bool_ else mask
            return self._trim(y_all)[rows]

        y = pallas_linear(X, self._w_p, self._b_p,
                          compute_dtype=self.compute_dtype,
                          out_dtype=self.out_dtype)
        return self._trim(y)


if __name__ == "__main__":
    key = jax.random.PRNGKey(0)
    k_x, k_src, k_tgt, k_mask, k_params = jax.random.split(key, 5)

    num_nodes, num_features, num_targets, num_edges = 16, 32, 8, 10

    X = jax.random.normal(k_x, (num_nodes, num_features), jnp.float32)

    # --- link prediction path (fused DMA gather) --------------------------
    source = jax.random.randint(k_src, (num_edges,), 0, num_nodes)
    target = jax.random.randint(k_tgt, (num_edges,), 0, num_nodes)
    snapshot_lp = {"link_pred_ids": (source, target)}
    model_lp = LinearReadout(num_features, num_targets,
                             link_prediction=True, key=k_params)
    y_lp = model_lp(X, snapshot_lp)
    jax.block_until_ready(y_lp)

    x_cat = jnp.concatenate([X[source], X[target]], axis=-1)
    y_lp_ref = x_cat @ model_lp.weight + model_lp.bias
    assert y_lp.shape == (num_edges, num_targets)
    assert jnp.allclose(y_lp, y_lp_ref, atol=1e-5), "link-pred mismatch"

    # --- node classification path (node_mask) -----------------------------
    node_mask = np.array(jax.random.bernoulli(k_mask, 0.5, (num_nodes,)))
    if not node_mask.any():
        node_mask[0] = True
    snapshot_node = {"node_mask": node_mask}
    model_node = LinearReadout(num_features, num_targets,
                               link_prediction=False, key=k_params)
    y_node = model_node(X, snapshot_node)
    jax.block_until_ready(y_node)

    x_masked = X[np.nonzero(node_mask)[0]]
    y_node_ref = x_masked @ model_node.weight + model_node.bias
    assert y_node.shape == (int(node_mask.sum()), num_targets)
    assert jnp.allclose(y_node, y_node_ref, atol=1e-5), "node-mask mismatch"

    # --- plain path (no mask) ----------------------------------------------
    y_plain = model_node(X, {})
    jax.block_until_ready(y_plain)
    y_plain_ref = X @ model_node.weight + model_node.bias
    assert y_plain.shape == (num_nodes, num_targets)
    assert jnp.allclose(y_plain, y_plain_ref, atol=1e-5), "plain mismatch"

    print("KERNEL_OK")
</pallas_src>

<mosaic_0001>
module attributes {stable_mosaic.version = 11 : i64} {
  func.func @_lp_gather_kernel(%arg0: i32, %arg1: memref<16xi32, #tpu.memory_space<smem>>, %arg2: memref<16xi32, #tpu.memory_space<smem>>, %arg3: memref<16x32xf32, #tpu.memory_space<any>>, %arg4: memref<32x8xf32, #tpu.memory_space<vmem>>, %arg5: memref<32x8xf32, #tpu.memory_space<vmem>>, %arg6: memref<1x8xf32, #tpu.memory_space<vmem>>, %arg7: memref<16x8xf32, #tpu.memory_space<vmem>>, %arg8: memref<16x32xf32, #tpu.memory_space<vmem>>, %arg9: memref<16x32xf32, #tpu.memory_space<vmem>>, %arg10: memref<2x!tpu.dma_semaphore, #tpu.memory_space<semaphore_mem>>) attributes {dimension_semantics = [#tpu.dimension_semantics<arbitrary>], iteration_bounds = array<i64: 1>, scalar_prefetch = 2 : i64, scratch_operands = 3 : i64, tpu.core_type = #tpu.core_type<tc>, window_params = [{}, {pipeline_mode = #tpu.pipeline_mode<synchronous>, transform_indices = @transform_1, window_bounds = array<i64: 32, 8>}, {pipeline_mode = #tpu.pipeline_mode<synchronous>, transform_indices = @transform_2, window_bounds = array<i64: 32, 8>}, {pipeline_mode = #tpu.pipeline_mode<synchronous>, transform_indices = @transform_3, window_bounds = array<i64: 1, 8>}, {transform_indices = @transform_4, window_bounds = array<i64: 16, 8>}]} {
    %c16_i32 = arith.constant 16 : i32
    %0 = arith.muli %arg0, %c16_i32 : i32
    %c0_i32 = arith.constant 0 : i32
    %c16_i32_0 = arith.constant 16 : i32
    %1 = arith.addi %c0_i32, %c16_i32_0 : i32
    %c1_i32 = arith.constant 1 : i32
    scf.for %arg11 = %c0_i32 to %1 step %c1_i32  : i32 {
      %14 = arith.addi %0, %arg11 : i32
      %15 = arith.index_cast %14 : i32 to index
      %16 = memref.load %arg1[%15] : memref<16xi32, #tpu.memory_space<smem>>
      %17 = arith.addi %0, %arg11 : i32
      %18 = arith.index_cast %17 : i32 to index
      %19 = memref.load %arg2[%18] : memref<16xi32, #tpu.memory_space<smem>>
      %c0_i32_17 = arith.constant 0 : i32
      %c0_i32_18 = arith.constant 0 : i32
      %20 = tpu.memref_slice %arg3[%16, %c0_i32_18] : memref<16x32xf32, #tpu.memory_space<any>> -> memref<1x32xf32, #tpu.memory_space<any>>
      %c0_i32_19 = arith.constant 0 : i32
      %21 = tpu.memref_slice %arg8[%arg11, %c0_i32_19] : memref<16x32xf32, #tpu.memory_space<vmem>> -> memref<1x32xf32, #tpu.memory_space<vmem>>
      %22 = tpu.memref_slice %arg10[%c0_i32_17] : memref<2x!tpu.dma_semaphore, #tpu.memory_space<semaphore_mem>> -> memref<1x!tpu.dma_semaphore, #tpu.memory_space<semaphore_mem>>
      %23 = tpu.memref_squeeze %22 : memref<1x!tpu.dma_semaphore, #tpu.memory_space<semaphore_mem>> -> memref<!tpu.dma_semaphore, #tpu.memory_space<semaphore_mem>>
      tpu.enqueue_dma source(%20 : memref<1x32xf32, #tpu.memory_space<any>>) target(%21 : memref<1x32xf32, #tpu.memory_space<vmem>>) target_semaphore(%23 : memref<!tpu.dma_semaphore, #tpu.memory_space<semaphore_mem>>)
      %c1_i32_20 = arith.constant 1 : i32
      %c0_i32_21 = arith.constant 0 : i32
      %24 = tpu.memref_slice %arg3[%19, %c0_i32_21] : memref<16x32xf32, #tpu.memory_space<any>> -> memref<1x32xf32, #tpu.memory_space<any>>
      %c0_i32_22 = arith.constant 0 : i32
      %25 = tpu.memref_slice %arg9[%arg11, %c0_i32_22] : memref<16x32xf32, #tpu.memory_space<vmem>> -> memref<1x32xf32, #tpu.memory_space<vmem>>
      %26 = tpu.memref_slice %arg10[%c1_i32_20] : memref<2x!tpu.dma_semaphore, #tpu.memory_space<semaphore_mem>> -> memref<1x!tpu.dma_semaphore, #tpu.memory_space<semaphore_mem>>
      %27 = tpu.memref_squeeze %26 : memref<1x!tpu.dma_semaphore, #tpu.memory_space<semaphore_mem>> -> memref<!tpu.dma_semaphore, #tpu.memory_space<semaphore_mem>>
      tpu.enqueue_dma source(%24 : memref<1x32xf32, #tpu.memory_space<any>>) target(%25 : memref<1x32xf32, #tpu.memory_space<vmem>>) target_semaphore(%27 : memref<!tpu.dma_semaphore, #tpu.memory_space<semaphore_mem>>)
    }
    %c16_i32_1 = arith.constant 16 : i32
    %c0_i32_2 = arith.constant 0 : i32
    %c16_i32_3 = arith.constant 16 : i32
    %2 = arith.addi %c0_i32_2, %c16_i32_3 : i32
    %c1_i32_4 = arith.constant 1 : i32
    scf.for %arg11 = %c0_i32_2 to %2 step %c1_i32_4  : i32 {
      %c0_i32_17 = arith.constant 0 : i32
      %c0_i32_18 = arith.constant 0 : i32
      %c0_i32_19 = arith.constant 0 : i32
      %14 = tpu.memref_slice %arg3[%c0_i32_18, %c0_i32_19] : memref<16x32xf32, #tpu.memory_space<any>> -> memref<1x32xf32, #tpu.memory_space<any>>
      %c0_i32_20 = arith.constant 0 : i32
      %c0_i32_21 = arith.constant 0 : i32
      %15 = tpu.memref_slice %arg8[%c0_i32_20, %c0_i32_21] : memref<16x32xf32, #tpu.memory_space<vmem>> -> memref<1x32xf32, #tpu.memory_space<vmem>>
      %16 = tpu.memref_slice %arg10[%c0_i32_17] : memref<2x!tpu.dma_semaphore, #tpu.memory_space<semaphore_mem>> -> memref<1x!tpu.dma_semaphore, #tpu.memory_space<semaphore_mem>>
      %17 = tpu.memref_squeeze %16 : memref<1x!tpu.dma_semaphore, #tpu.memory_space<semaphore_mem>> -> memref<!tpu.dma_semaphore, #tpu.memory_space<semaphore_mem>>
      tpu.wait_dma2 semaphore(%17 : memref<!tpu.dma_semaphore, #tpu.memory_space<semaphore_mem>>) src(%14 : memref<1x32xf32, #tpu.memory_space<any>>) dst(%15 : memref<1x32xf32, #tpu.memory_space<vmem>>)
      %c1_i32_22 = arith.constant 1 : i32
      %c0_i32_23 = arith.constant 0 : i32
      %c0_i32_24 = arith.constant 0 : i32
      %18 = tpu.memref_slice %arg3[%c0_i32_23, %c0_i32_24] : memref<16x32xf32, #tpu.memory_space<any>> -> memref<1x32xf32, #tpu.memory_space<any>>
      %c0_i32_25 = arith.constant 0 : i32
      %c0_i32_26 = arith.constant 0 : i32
      %19 = tpu.memref_slice %arg9[%c0_i32_25, %c0_i32_26] : memref<16x32xf32, #tpu.memory_space<vmem>> -> memref<1x32xf32, #tpu.memory_space<vmem>>
      %20 = tpu.memref_slice %arg10[%c1_i32_22] : memref<2x!tpu.dma_semaphore, #tpu.memory_space<semaphore_mem>> -> memref<1x!tpu.dma_semaphore, #tpu.memory_space<semaphore_mem>>
      %21 = tpu.memref_squeeze %20 : memref<1x!tpu.dma_semaphore, #tpu.memory_space<semaphore_mem>> -> memref<!tpu.dma_semaphore, #tpu.memory_space<semaphore_mem>>
      tpu.wait_dma2 semaphore(%21 : memref<!tpu.dma_semaphore, #tpu.memory_space<semaphore_mem>>) src(%18 : memref<1x32xf32, #tpu.memory_space<any>>) dst(%19 : memref<1x32xf32, #tpu.memory_space<vmem>>)
    }
    %c0 = arith.constant 0 : index
    %c0_5 = arith.constant 0 : index
    %3 = vector.load %arg8[%c0, %c0_5] : memref<16x32xf32, #tpu.memory_space<vmem>>, vector<16x32xf32>
    %c0_6 = arith.constant 0 : index
    %c0_7 = arith.constant 0 : index
    %4 = vector.load %arg4[%c0_6, %c0_7] : memref<32x8xf32, #tpu.memory_space<vmem>>, vector<32x8xf32>
    %cst = arith.constant dense<0.000000e+00> : vector<16x8xf32>
    %5 = tpu.matmul %3, %4, %cst {dimension_numbers = #tpu.dot_dimension_numbers<[1], [0], [0], [1], [0, 0, 1, 1], [], []>} : vector<16x32xf32>, vector<32x8xf32>, vector<16x8xf32> -> vector<16x8xf32>
    %c0_8 = arith.constant 0 : index
    %c0_9 = arith.constant 0 : index
    %6 = vector.load %arg9[%c0_8, %c0_9] : memref<16x32xf32, #tpu.memory_space<vmem>>, vector<16x32xf32>
    %c0_10 = arith.constant 0 : index
    %c0_11 = arith.constant 0 : index
    %7 = vector.load %arg5[%c0_10, %c0_11] : memref<32x8xf32, #tpu.memory_space<vmem>>, vector<32x8xf32>
    %cst_12 = arith.constant dense<0.000000e+00> : vector<16x8xf32>
    %8 = tpu.matmul %6, %7, %cst_12 {dimension_numbers = #tpu.dot_dimension_numbers<[1], [0], [0], [1], [0, 0, 1, 1], [], []>} : vector<16x32xf32>, vector<32x8xf32>, vector<16x8xf32> -> vector<16x8xf32>
    %9 = arith.addf %5, %8 : vector<16x8xf32>
    %c0_13 = arith.constant 0 : index
    %c0_14 = arith.constant 0 : index
    %10 = vector.load %arg6[%c0_13, %c0_14] : memref<1x8xf32, #tpu.memory_space<vmem>>, vector<1x8xf32>
    %11 = vector.broadcast %10 : vector<1x8xf32> to vector<16x8xf32>
    %12 = arith.addf %9, %11 : vector<16x8xf32>
    %c0_15 = arith.constant 0 : index
    %c0_16 = arith.constant 0 : index
    %13 = vector.load %arg7[%c0_15, %c0_16] : memref<16x8xf32, #tpu.memory_space<vmem>>, vector<16x8xf32>
    tpu.vector_store %arg7[%c0_15, %c0_16], %12 {strides = array<i32>} : memref<16x8xf32, #tpu.memory_space<vmem>>, vector<16x8xf32>,
    return
  }
  func.func @transform_1(%arg0: i32, %arg1: memref<16xi32, #tpu.memory_space<smem>>, %arg2: memref<16xi32, #tpu.memory_space<smem>>) -> (i32, i32) {
    %c0_i32 = arith.constant 0 : i32
    %c0_i32_0 = arith.constant 0 : i32
    %c0_i32_1 = arith.constant 0 : i32
    return %c0_i32, %c0_i32_0 : i32, i32
  }
  func.func @transform_2(%arg0: i32, %arg1: memref<16xi32, #tpu.memory_space<smem>>, %arg2: memref<16xi32, #tpu.memory_space<smem>>) -> (i32, i32) {
    %c0_i32 = arith.constant 0 : i32
    %c0_i32_0 = arith.constant 0 : i32
    %c0_i32_1 = arith.constant 0 : i32
    return %c0_i32, %c0_i32_0 : i32, i32
  }
  func.func @transform_3(%arg0: i32, %arg1: memref<16xi32, #tpu.memory_space<smem>>, %arg2: memref<16xi32, #tpu.memory_space<smem>>) -> (i32, i32) {
    %c0_i32 = arith.constant 0 : i32
    %c0_i32_0 = arith.constant 0 : i32
    %c0_i32_1 = arith.constant 0 : i32
    return %c0_i32, %c0_i32_0 : i32, i32
  }
  func.func @transform_4(%arg0: i32, %arg1: memref<16xi32, #tpu.memory_space<smem>>, %arg2: memref<16xi32, #tpu.memory_space<smem>>) -> (i32, i32) {
    %c0_i32 = arith.constant 0 : i32
    %c0_i32_0 = arith.constant 0 : i32
    return %arg0, %c0_i32 : i32, i32
  }
}

</mosaic_0001>

<llo_original>
// kernel: tpu_custom_call.1
$region0: #{tpu_custom_call.1}
  #allocation0 [shape = 'u32[]', space=smem, size = 0x4, offset = 0x4, fixed_abs, tag = 'smem constant byte address 0x4 - core index']
  #allocation1 [shape = 'u32[144,128]{1,0:T(1,128)}', space=vmem, size = 0x12000, scoped, tag = 'internal scratch']
  #allocation2 [shape = 'f32[16,32]{1,0:T(8,128)}', space=vmem, size = 0x2000, scoped, tag = 'scratch operand']
  #allocation3 [shape = 'f32[16,32]{1,0:T(8,128)}', space=vmem, size = 0x2000, scoped, tag = 'scratch operand']
  #allocation4 [shape = 's32[2]{0}', space=sflag, size = 0x8, scoped, tag = 'scratch operand']
  #allocation5 [shape = 's32[1]{0}', space=sflag, size = 0x4, scoped, tag = 'scoped memory for tpu_custom_call.1']
  #allocation6 [shape = 'u8[512]{0}', space=smem, size = 0x200, scoped, tag = 'prefetched SMEM operand 0']
  #allocation7 [shape = 'u8[512]{0}', space=smem, size = 0x200, scoped, tag = 'prefetched SMEM operand 1']
  #allocation8 [shape = 's32[]', space=sflag, size = 0x4, offset = 0, fixed_abs, tag = 'sflag constant byte address 0x0 - dummy sync flag']
  #allocation9 [shape = 's32[]', space=sflag, size = 0x4, offset = 0, fixed_abs, tag = 'sflag constant byte address 0x0 - dummy sync flag']
  %s0 = inlined_call_operand.vmem [shape: s32[16], index: 0, kind: input, shape index: {}]
  %s1 = inlined_call_operand.vmem [shape: s32[16], index: 1, kind: input, shape index: {}]
  %s2 = inlined_call_operand.vmem [shape: f32[16,32], index: 2, kind: input, shape index: {}]
  %s3 = inlined_call_operand.vmem [shape: f32[32,8], index: 3, kind: input, shape index: {}]
  %s4 = inlined_call_operand.vmem [shape: f32[32,8], index: 4, kind: input, shape index: {}]
  %s5 = inlined_call_operand.vmem [shape: f32[1,8], index: 5, kind: input, shape index: {}]
  %s6 = inlined_call_operand.vmem [shape: f32[16,8], index: 6, kind: output, shape index: {}]
  %s7 = sld [smem:[#allocation0]]
  $region96: #{tpu_custom_call.1} parent=0
    _
  %s9 = ssub.s32 1, %s7
  %s10 = scalar_select 0, %s9, %s7
  %s11 = sshll.u32 %s0, 4
  %s12 = int_to_ptr.vmem [resolvable:$true] %s11
  %14 = dma.vmem_to_smem %s12, 16, [#allocation6], [#allocation5]
  %s15 = sshll.u32 %s1, 4
  %s16 = int_to_ptr.vmem [resolvable:$true] %s15
  %18 = dma.vmem_to_smem %s16, 16, [#allocation7], [#allocation5]
  %19 = dma.done [#allocation5], 32
  %20 = sfence
  // Predicated region
  $region2: #{tpu_custom_call.1} parent=0 // pred_check
    _
  $region3: #{tpu_custom_call.1} parent=0 // pred_check_branch
    %22 = sbr.rel (0) target = $region5
  $region4: #{tpu_custom_call.1} parent=0 // pred_region
    _
  $region5: #{tpu_custom_call.1} parent=0 // pred_fallthru
    _
  // Predicated region
  $region6: #{tpu_custom_call.1} parent=0 // pred_check
    _
  $region7: #{tpu_custom_call.1} parent=0 // pred_check_branch
    %24 = sbr.rel (0) target = $region9
  $region8: #{tpu_custom_call.1} parent=0 // pred_region
    _
  $region9: #{tpu_custom_call.1} parent=0 // pred_fallthru
    _
  // Predicated region
  $region10: #{tpu_custom_call.1} parent=0 // pred_check
    _
  $region11: #{tpu_custom_call.1} parent=0 // pred_check_branch
    %26 = sbr.rel (0) target = $region13
  $region12: #{tpu_custom_call.1} parent=0 // pred_region
    _
  $region13: #{tpu_custom_call.1} parent=0 // pred_fallthru
    _
  %s27 = smul.u32 0, 16
  loop: start=0, step=1, limit=16
  $region14: #{tpu_custom_call.1} parent=0 // loop_pre_header
    _
  $region15: #{tpu_custom_call.1} parent=0 // loop_header
    %s29 = sphi 0, %s33
    %p30 = scmp.ge.s32.totalorder %s29, 16
  $region16: #{tpu_custom_call.1} parent=0 // loop_header_branch
    %32 = sbr.rel (%p30) target = $region20
  $region17: #{tpu_custom_call.1} parent=0 // loop_body
    %s34 = sadd.s32 %s27, %s29
    %s35 = sld [smem:[#allocation6 + %s34]]
    %s36 = sld [smem:[#allocation7 + %s34]]
    %s37 = scalar_lea.vmem %s2, %s35
    %s38 = scalar_lea.vmem [#allocation2], %s29
    %p40 = scmp.lt.u32.totalorder 1, 8
    %p41 = pneg %p40
    // Predicated region
    $region21: #{tpu_custom_call.1} parent=17 // pred_check
      _
    $region22: #{tpu_custom_call.1} parent=17 // pred_check_branch
      %43 = sbr.rel (%p40) target = $region24
    $region23: #{tpu_custom_call.1} parent=17 // pred_region
      %s58 = sand.u32 1, 7
      %p59 = scmp.eq.s32.totalorder %s58, 0
      %p60 = pneg %p59
      // Predicated region
      $region36: #{tpu_custom_call.1} parent=23 // pred_check
        _
      $region37: #{tpu_custom_call.1} parent=23 // pred_check_branch
        %62 = sbr.rel (%p59) target = $region39
      $region38: #{tpu_custom_call.1} parent=23 // pred_region
        %s63 = sand.u32 1, 7
        %s64 = ssub.s32 1, %s63
        %s65 = scalar_lea.vmem %s37, %s64
        %s66 = ssub.s32 1, %s63
        %s67 = scalar_lea.vmem %s38, %s66 [#allocation2]
        %s68 = sshllo.u32 0, %s63
        loop: start=0, step=1, limit=1
        $region40: #{tpu_custom_call.1} parent=38 // loop_pre_header
          _
        $region41: #{tpu_custom_call.1} parent=38 // loop_header
          %s70 = sphi 0, %s74
          %p71 = scmp.ge.s32.totalorder %s70, 1
          %s75 = sphi %s65, %s65
          %s76 = sphi %s67, %s67
        $region42: #{tpu_custom_call.1} parent=38 // loop_header_branch
          %73 = sbr.rel (%p71) target = $region46
        $region43: #{tpu_custom_call.1} parent=38 // loop_body
          %v77 = vld [vmem:[%s75] sm:%s68]
          %78 = vst [vmem:[%s76] sm:%s68] %v77
        $region44: #{tpu_custom_call.1} parent=38 // loop_footer
          %s74 = sadd.s32 1, %s70
        $region45: #{tpu_custom_call.1} parent=38 // loop_footer_branch
          %69 = sbr.rel target = $region41
        $region46: #{tpu_custom_call.1} parent=38 // loop_exit
          _
      $region39: #{tpu_custom_call.1} parent=23 // pred_fallthru
        _
    $region24: #{tpu_custom_call.1} parent=17 // pred_fallthru
      _
    // Predicated region
    $region25: #{tpu_custom_call.1} parent=17 // pred_check
      %p44 = pneg %p40
    $region26: #{tpu_custom_call.1} parent=17 // pred_check_branch
      %46 = sbr.rel (%p44) target = $region28
    $region27: #{tpu_custom_call.1} parent=17 // pred_region
      %s47 = sshllo.u32 0, 1
      loop: start=0, step=1, limit=1
      $region29: #{tpu_custom_call.1} parent=27 // loop_pre_header
        _
      $region30: #{tpu_custom_call.1} parent=27 // loop_header
        %s49 = sphi 0, %s53
        %p50 = scmp.ge.s32.totalorder %s49, 1
        %s54 = sphi %s37, %s37
        %s55 = sphi %s38, %s38
      $region31: #{tpu_custom_call.1} parent=27 // loop_header_branch
        %52 = sbr.rel (%p50) target = $region35
      $region32: #{tpu_custom_call.1} parent=27 // loop_body
        %v56 = vld [vmem:[%s54] sm:%s47]
        %57 = vst [vmem:[%s55] sm:%s47] %v56
      $region33: #{tpu_custom_call.1} parent=27 // loop_footer
        %s53 = sadd.s32 1, %s49
      $region34: #{tpu_custom_call.1} parent=27 // loop_footer_branch
        %48 = sbr.rel target = $region30
      $region35: #{tpu_custom_call.1} parent=27 // loop_exit
        _
    $region28: #{tpu_custom_call.1} parent=17 // pred_fallthru
      _
    // Predicated region
    $region47: #{tpu_custom_call.1} parent=17 // pred_check
      _
    $region48: #{tpu_custom_call.1} parent=17 // pred_check_branch
      %81 = sbr.rel (0) target = $region50
    $region49: #{tpu_custom_call.1} parent=17 // pred_region
      %82 = vsyncadd [#allocation4], 16
    $region50: #{tpu_custom_call.1} parent=17 // pred_fallthru
      _
    %s83 = scalar_lea.vmem %s2, %s36
    %s84 = scalar_lea.vmem [#allocation3], %s29
    %s85 = scalar_lea.sflag [#allocation4], 1
    %p87 = scmp.lt.u32.totalorder 1, 8
    %p88 = pneg %p87
    // Predicated region
    $region51: #{tpu_custom_call.1} parent=17 // pred_check
      _
    $region52: #{tpu_custom_call.1} parent=17 // pred_check_branch
      %90 = sbr.rel (%p87) target = $region54
    $region53: #{tpu_custom_call.1} parent=17 // pred_region
      %s105 = sand.u32 1, 7
      %p106 = scmp.eq.s32.totalorder %s105, 0
      %p107 = pneg %p106
      // Predicated region
      $region66: #{tpu_custom_call.1} parent=53 // pred_check
        _
      $region67: #{tpu_custom_call.1} parent=53 // pred_check_branch
        %109 = sbr.rel (%p106) target = $region69
      $region68: #{tpu_custom_call.1} parent=53 // pred_region
        %s110 = sand.u32 1, 7
        %s111 = ssub.s32 1, %s110
        %s112 = scalar_lea.vmem %s83, %s111
        %s113 = ssub.s32 1, %s110
        %s114 = scalar_lea.vmem %s84, %s113 [#allocation3]
        %s115 = sshllo.u32 0, %s110
        loop: start=0, step=1, limit=1
        $region70: #{tpu_custom_call.1} parent=68 // loop_pre_header
          _
        $region71: #{tpu_custom_call.1} parent=68 // loop_header
          %s117 = sphi 0, %s121
          %p118 = scmp.ge.s32.totalorder %s117, 1
          %s122 = sphi %s112, %s112
          %s123 = sphi %s114, %s114
        $region72: #{tpu_custom_call.1} parent=68 // loop_header_branch
          %120 = sbr.rel (%p118) target = $region76
        $region73: #{tpu_custom_call.1} parent=68 // loop_body
          %v124 = vld [vmem:[%s122] sm:%s115]
          %125 = vst [vmem:[%s123] sm:%s115] %v124
        $region74: #{tpu_custom_call.1} parent=68 // loop_footer
          %s121 = sadd.s32 1, %s117
        $region75: #{tpu_custom_call.1} parent=68 // loop_footer_branch
          %116 = sbr.rel target = $region71
        $region76: #{tpu_custom_call.1} parent=68 // loop_exit
          _
      $region69: #{tpu_custom_call.1} parent=53 // pred_fallthru
        _
    $region54: #{tpu_custom_call.1} parent=17 // pred_fallthru
      _
    // Predicated region
    $region55: #{tpu_custom_call.1} parent=17 // pred_check
      %p91 = pneg %p87
    $region56: #{tpu_custom_call.1} parent=17 // pred_check_branch
      %93 = sbr.rel (%p91) target = $region58
    $region57: #{tpu_custom_call.1} parent=17 // pred_region
      %s94 = sshllo.u32 0, 1
      loop: start=0, step=1, limit=1
      $region59: #{tpu_custom_call.1} parent=57 // loop_pre_header
        _
      $region60: #{tpu_custom_call.1} parent=57 // loop_header
        %s96 = sphi 0, %s100
        %p97 = scmp.ge.s32.totalorder %s96, 1
        %s101 = sphi %s83, %s83
        %s102 = sphi %s84, %s84
      $region61: #{tpu_custom_call.1} parent=57 // loop_header_branch
        %99 = sbr.rel (%p97) target = $region65
      $region62: #{tpu_custom_call.1} parent=57 // loop_body
        %v103 = vld [vmem:[%s101] sm:%s94]
        %104 = vst [vmem:[%s102] sm:%s94] %v103
      $region63: #{tpu_custom_call.1} parent=57 // loop_footer
        %s100 = sadd.s32 1, %s96
      $region64: #{tpu_custom_call.1} parent=57 // loop_footer_branch
        %95 = sbr.rel target = $region60
      $region65: #{tpu_custom_call.1} parent=57 // loop_exit
        _
    $region58: #{tpu_custom_call.1} parent=17 // pred_fallthru
      _
    // Predicated region
    $region77: #{tpu_custom_call.1} parent=17 // pred_check
      _
    $region78: #{tpu_custom_call.1} parent=17 // pred_check_branch
      %128 = sbr.rel (0) target = $region80
    $region79: #{tpu_custom_call.1} parent=17 // pred_region
      %129 = vsyncadd %s85, 16
    $region80: #{tpu_custom_call.1} parent=17 // pred_fallthru
      _
  $region18: #{tpu_custom_call.1} parent=0 // loop_footer
    %s33 = sadd.s32 1, %s29
  $region19: #{tpu_custom_call.1} parent=0 // loop_footer_branch
    %28 = sbr.rel target = $region15
  $region20: #{tpu_custom_call.1} parent=0 // loop_exit
    _
  loop: start=0, step=1, limit=16
  $region81: #{tpu_custom_call.1} parent=0 // loop_pre_header
    _
  $region82: #{tpu_custom_call.1} parent=0 // loop_header
    %s131 = sphi 0, %s135
    %p132 = scmp.ge.s32.totalorder %s131, 16
  $region83: #{tpu_custom_call.1} parent=0 // loop_header_branch
    %134 = sbr.rel (%p132) target = $region87
  $region84: #{tpu_custom_call.1} parent=0 // loop_body
    %s136 = smul.u32 1, 1
    %s137 = sshll.u32 %s136, 4
    %138 = dma.done [#allocation4], %s137
    %s139 = scalar_lea.sflag [#allocation4], 1
    %s140 = sshll.u32 %s136, 4
    %141 = dma.done %s139, %s140
  $region85: #{tpu_custom_call.1} parent=0 // loop_footer
    %s135 = sadd.s32 1, %s131
  $region86: #{tpu_custom_call.1} parent=0 // loop_footer_branch
    %130 = sbr.rel target = $region82
  $region87: #{tpu_custom_call.1} parent=0 // loop_exit
    _
  %v142 = vld [vmem:[#allocation2] sm:$0xff]
  %v143 = vld [vmem:[#allocation2 + $0x8] sm:$0xff]
  %v144 = vld [vmem:[%s3] sm:$0xff]
  %v145 = vld [vmem:[%s3 + $0x8] sm:$0xff]
  %v146 = vld [vmem:[%s3 + $0x10] sm:$0xff]
  %v147 = vld [vmem:[%s3 + $0x18] sm:$0xff]
  %v148 = vld [vmem:[#allocation3] sm:$0xff]
  %v149 = vld [vmem:[#allocation3 + $0x8] sm:$0xff]
  %v150 = vld [vmem:[%s4] sm:$0xff]
  %v151 = vld [vmem:[%s4 + $0x8] sm:$0xff]
  %v152 = vld [vmem:[%s4 + $0x10] sm:$0xff]
  %v153 = vld [vmem:[%s4 + $0x18] sm:$0xff]
  %vm154 = vcmask 261120
  %v156 = vsel %vm154, %v148, 0
  %v159 = vsel %vm154, %v149, 0
  %161 = vmatprep.subr.mxu0 0.0
  %162 = vmatpush1.msra.mxu0 %v150
  %163 = vmatprep.subr.mxu0 0.0
  %164 = vmatpush1.msra.mxu0 %v151
  %165 = vmatprep.subr.mxu0 0.0
  %166 = vmatpush1.msra.mxu0 %v152
  %167 = vmatprep.subr.mxu0 0.0
  %168 = vmatpush1.msra.mxu0 %v153
  %169 = vmatprep.subr.mxu0 0.0
  %170 = vmatpush1.msra.mxu0 0.0
  %171 = vmatprep.subr.mxu0 0.0
  %172 = vmatpush1.msra.mxu0 0.0
  %173 = vmatprep.subr.mxu0 0.0
  %174 = vmatpush1.msra.mxu0 0.0
  %175 = vmatprep.subr.mxu0 0.0
  %176 = vmatpush1.msra.mxu0 0.0
  %177 = vmatprep.subr.mxu0 0.0
  %178 = vmatpush1.msra.mxu0 0.0
  %179 = vmatprep.subr.mxu0 0.0
  %180 = vmatpush1.msra.mxu0 0.0
  %181 = vmatprep.subr.mxu0 0.0
  %182 = vmatpush1.msra.mxu0 0.0
  %183 = vmatprep.subr.mxu0 0.0
  %184 = vmatpush1.msra.mxu0 0.0
  %185 = vmatprep.subr.mxu0 0.0
  %186 = vmatpush1.msra.mxu0 0.0
  %187 = vmatprep.subr.mxu0 0.0
  %188 = vmatpush1.msra.mxu0 0.0
  %189 = vmatprep.subr.mxu0 0.0
  %190 = vmatpush1.msra.mxu0 0.0
  %191 = vmatprep.subr.mxu0 0.0
  %192 = vmatpush1.msra.mxu0 0.0
  %193 = vmatprep.subr.mxu0 0.0
  %194 = vmatpush1.msra.mxu0 0.0
  %195 = vmatprep.subr.mxu0 0.0
  %196 = vmatpush1.msra.mxu0 0.0
  %197 = vmatprep.subr.mxu0 0.0
  %198 = vmatpush1.msra.mxu0 0.0
  %199 = vmatprep.subr.mxu0 0.0
  %200 = vmatpush1.msra.mxu0 0.0
  %201 = vmatprep.subr.mxu0 0.0
  %202 = vmatpush1.msra.mxu0 0.0
  %203 = vmatprep.subr.mxu0 0.0
  %204 = vmatpush1.msra.mxu0 0.0
  %205 = vmatprep.subr.mxu0 0.0
  %206 = vmatpush1.msra.mxu0 0.0
  %207 = vmatprep.subr.mxu0 0.0
  %208 = vmatpush1.msra.mxu0 0.0
  %209 = vmatprep.subr.mxu0 0.0
  %210 = vmatpush1.msra.mxu0 0.0
  %211 = vmatprep.subr.mxu0 0.0
  %212 = vmatpush1.msra.mxu0 0.0
  %213 = vmatprep.subr.mxu0 0.0
  %214 = vmatpush1.msra.mxu0 0.0
  %215 = vmatprep.subr.mxu0 0.0
  %216 = vmatpush1.msra.mxu0 0.0
  %217 = vmatprep.subr.mxu0 0.0
  %218 = vmatpush1.msra.mxu0 0.0
  %219 = vmatprep.subr.mxu0 0.0
  %220 = vmatpush1.msra.mxu0 0.0
  %221 = vmatprep.subr.mxu0 0.0
  %222 = vmatpush1.msra.mxu0 0.0
  %223 = vmatprep.subr.mxu0 0.0
  %224 = vmatpush1.msra.mxu0 0.0
  %225 = vmatprep.mubr.f32.mxu0 0.0
  %226 = vmatmul.mubr.f32.gmra.mrb[0].mxu0 %v156
  %v227 = vpop.f32.mrb[0].mxu0
  %v228 = vadd.f32 0.0, %v227
  %v229 = vpop.f32.mrb[0].mxu0
  %230 = vmatprep.mubr.f32.mxu0 0.0
  %231 = vmatmul.mubr.f32.gmra.mrb[0].mxu0 %v159
  %v232 = vpop.f32.mrb[0].mxu0
  %v233 = vadd.f32 0.0, %v232
  %v234 = vpop.f32.mrb[0].mxu0
  %235 = vdwg.mxu0
  %v237 = vsel %vm154, %v142, 0
  %v240 = vsel %vm154, %v143, 0
  %242 = vmatprep.subr.mxu0 0.0
  %243 = vmatpush1.msra.mxu0 %v144
  %244 = vmatprep.subr.mxu0 0.0
  %245 = vmatpush1.msra.mxu0 %v145
  %246 = vmatprep.subr.mxu0 0.0
  %247 = vmatpush1.msra.mxu0 %v146
  %248 = vmatprep.subr.mxu0 0.0
  %249 = vmatpush1.msra.mxu0 %v147
  %250 = vmatprep.subr.mxu0 0.0
  %251 = vmatpush1.msra.mxu0 0.0
  %252 = vmatprep.subr.mxu0 0.0
  %253 = vmatpush1.msra.mxu0 0.0
  %254 = vmatprep.subr.mxu0 0.0
  %255 = vmatpush1.msra.mxu0 0.0
  %256 = vmatprep.subr.mxu0 0.0
  %257 = vmatpush1.msra.mxu0 0.0
  %258 = vmatprep.subr.mxu0 0.0
  %259 = vmatpush1.msra.mxu0 0.0
  %260 = vmatprep.subr.mxu0 0.0
  %261 = vmatpush1.msra.mxu0 0.0
  %262 = vmatprep.subr.mxu0 0.0
  %263 = vmatpush1.msra.mxu0 0.0
  %264 = vmatprep.subr.mxu0 0.0
  %265 = vmatpush1.msra.mxu0 0.0
  %266 = vmatprep.subr.mxu0 0.0
  %267 = vmatpush1.msra.mxu0 0.0
  %268 = vmatprep.subr.mxu0 0.0
  %269 = vmatpush1.msra.mxu0 0.0
  %270 = vmatprep.subr.mxu0 0.0
  %271 = vmatpush1.msra.mxu0 0.0
  %272 = vmatprep.subr.mxu0 0.0
  %273 = vmatpush1.msra.mxu0 0.0
  %274 = vmatprep.subr.mxu0 0.0
  %275 = vmatpush1.msra.mxu0 0.0
  %276 = vmatprep.subr.mxu0 0.0
  %277 = vmatpush1.msra.mxu0 0.0
  %278 = vmatprep.subr.mxu0 0.0
  %279 = vmatpush1.msra.mxu0 0.0
  %280 = vmatprep.subr.mxu0 0.0
  %281 = vmatpush1.msra.mxu0 0.0
  %282 = vmatprep.subr.mxu0 0.0
  %283 = vmatpush1.msra.mxu0 0.0
  %284 = vmatprep.subr.mxu0 0.0
  %285 = vmatpush1.msra.mxu0 0.0
  %286 = vmatprep.subr.mxu0 0.0
  %287 = vmatpush1.msra.mxu0 0.0
  %288 = vmatprep.subr.mxu0 0.0
  %289 = vmatpush1.msra.mxu0 0.0
  %290 = vmatprep.subr.mxu0 0.0
  %291 = vmatpush1.msra.mxu0 0.0
  %292 = vmatprep.subr.mxu0 0.0
  %293 = vmatpush1.msra.mxu0 0.0
  %294 = vmatprep.subr.mxu0 0.0
  %295 = vmatpush1.msra.mxu0 0.0
  %296 = vmatprep.subr.mxu0 0.0
  %297 = vmatpush1.msra.mxu0 0.0
  %298 = vmatprep.subr.mxu0 0.0
  %299 = vmatpush1.msra.mxu0 0.0
  %300 = vmatprep.subr.mxu0 0.0
  %301 = vmatpush1.msra.mxu0 0.0
  %302 = vmatprep.subr.mxu0 0.0
  %303 = vmatpush1.msra.mxu0 0.0
  %304 = vmatprep.subr.mxu0 0.0
  %305 = vmatpush1.msra.mxu0 0.0
  %306 = vmatprep.mubr.f32.mxu0 0.0
  %307 = vmatmul.mubr.f32.gmra.mrb[0].mxu0 %v237
  %v308 = vpop.f32.mrb[0].mxu0
  %v309 = vadd.f32 %v228, %v308
  %v310 = vpop.f32.mrb[0].mxu0
  %311 = vmatprep.mubr.f32.mxu0 0.0
  %312 = vmatmul.mubr.f32.gmra.mrb[0].mxu0 %v240
  %v313 = vpop.f32.mrb[0].mxu0
  %v314 = vadd.f32 %v233, %v313
  %v315 = vpop.f32.mrb[0].mxu0
  %316 = vdwg.mxu0
  %v317 = vld [vmem:[%s5] sm:$0x1]
  %v319 = vlaneseq
  %v320 = vshrl.u32 %v319, 7
  %v321 = vsub.s32 0, %v320
  %v322 = vrot.slane %v317, %v321
  %v324 = vadd.f32 %v309, %v322
  %v325 = vadd.f32 %v314, %v322
  %vm326 = vcmask 64512
  %327 = vst.msk [vmem:[%s6] sm:$0xff] %vm326, %v324
  %328 = vst.msk [vmem:[%s6 + $0x8] sm:$0xff] %vm326, %v325
  // Predicated region
  $region88: #{tpu_custom_call.1} parent=0 // pred_check
    _
  $region89: #{tpu_custom_call.1} parent=0 // pred_check_branch
    %330 = sbr.rel (0) target = $region91
  $region90: #{tpu_custom_call.1} parent=0 // pred_region
    _
  $region91: #{tpu_custom_call.1} parent=0 // pred_fallthru
    _
  // Predicated region
  $region92: #{tpu_custom_call.1} parent=0 // pred_check
    _
  $region93: #{tpu_custom_call.1} parent=0 // pred_check_branch
    %332 = sbr.rel (0) target = $region95
  $region94: #{tpu_custom_call.1} parent=0 // pred_region
    _
  $region95: #{tpu_custom_call.1} parent=0 // pred_fallthru
    _
  %333 = vsyncmov [#allocation4]
  %s334 = vpop.sfrf %333
  %p335 = scmp.eq.s32.totalorder %s334, 0
  %p336 = pneg %p335
  %338 = shalt.err (%p336)
  %s339 = scalar_lea.sflag [#allocation4], 1
  %340 = vsyncmov %s339
  %s341 = vpop.sfrf %340
  %p342 = scmp.eq.s32.totalorder %s341, 0
  %p343 = pneg %p342
  %345 = shalt.err (%p343)

</llo_original>
